<compile_context>
chip_gen: v7x
topology: tpu7x:2x2x1
jax: 0.10.0
libtpu: 0.0.40
codegen_flags: <defaults>
</compile_context>

<pallas_src>
from functools import partial

import jax
import jax.numpy as jnp
from jax import lax
from jax.experimental import pallas as pl
from jax.experimental.pallas import tpu as pltpu

HIDDEN = 32


def _mlp_kernel(x_ref, w2_ref, vec_ref, o_ref, *, chunk, use_bf16_dot):
    # ---- per-grid-step parameter extraction (hoisted out of the inner loop) ----
    v = vec_ref[...]                     # (32, 8) small params, one per lane column
    w1 = v[:, 0:1]                       # (32, 1)  fc1.weight column
    b1 = v[:, 1:2]                       # (32, 1)
    b2 = v[:, 2:3]                       # (32, 1)
    w3 = v[:, 3:4]                       # (32, 1)  fc3.weight as column
    b3 = v[0:1, 4:5]                     # (1, 1)

    w2 = w2_ref[...]                     # (32, 32) fc2.weight (out, in)
    w2d = w2.astype(jnp.bfloat16) if use_bf16_dot else w2

    tile_b = x_ref.shape[-1]
    n_chunks = tile_b // chunk           # static

    # ---- inner loop over lane sub-chunks: keeps (32, chunk) intermediates ----
    # ---- vreg-resident (no VMEM spill of full (32, tile_b) activations).  ----
    def body(c, carry):
        start = pl.multiple_of(c * chunk, chunk)
        x = x_ref[:, pl.ds(start, chunk)]                              # (1, chunk)

        # Layer 1: K=1 "matmul" on the VPU (broadcast multiply-add) + ReLU.
        h1 = jnp.maximum(w1 * x + b1, 0.0)                             # (32, chunk)

        # Layer 2: the only MXU matmul (optionally bf16 operands, f32 acc).
        h1d = h1.astype(jnp.bfloat16) if use_bf16_dot else h1
        h2 = jnp.dot(w2d, h1d, preferred_element_type=jnp.float32) + b2
        h2 = jnp.maximum(h2, 0.0)                                      # (32, chunk)

        # Layer 3: multiply + sublane reduce (XLU) instead of a M=1 matmul.
        out = jnp.sum(w3 * h2, axis=0, keepdims=True) + b3             # (1, chunk)

        o_ref[:, pl.ds(start, chunk)] = out.astype(o_ref.dtype)        # aligned store
        return carry

    lax.fori_loop(0, n_chunks, body, None, unroll=True)


def pack_small_params(params):
    """Pack the five small params into a (32, 8) block, one per lane column."""
    h = params["w2"].shape[0]
    vecs = jnp.zeros((h, 8), jnp.float32)
    vecs = vecs.at[:, 0].set(params["w1"][:, 0].astype(jnp.float32))
    vecs = vecs.at[:, 1].set(params["b1"].astype(jnp.float32))
    vecs = vecs.at[:, 2].set(params["b2"].astype(jnp.float32))
    vecs = vecs.at[:, 3].set(params["w3"][0, :].astype(jnp.float32))
    vecs = vecs.at[:, 4].set(jnp.full((h,), params["b3"][0], jnp.float32))
    return vecs


def parabola_net_forward(x, params, *, tile_b=16384, chunk=512, use_bf16_dot=True):
    """x: (N, 1) float32.  params: PyTorch-layout weights/biases.  Returns (N, 1)."""
    n, d_in = x.shape
    assert d_in == 1
    assert chunk % 128 == 0, "lane sub-chunk must be a multiple of 128"
    assert tile_b % chunk == 0, "batch tile must be a multiple of the sub-chunk"
    h = params["w2"].shape[0]

    # Clamp the tile so small batches don't pad up to a huge tile; still a
    # multiple of `chunk` (hence of 128).
    tile_b = max(chunk, min(tile_b, pl.cdiv(n, chunk) * chunk))

    w2 = params["w2"].astype(jnp.float32)        # (32, 32)
    vecs = pack_small_params(params)             # (32, 8)

    # Lane-dense layout: batch on the lane axis; pad only when necessary.
    n_blocks = pl.cdiv(n, tile_b)
    n_pad = n_blocks * tile_b
    x_row = x.reshape(1, n)
    if n_pad != n:
        x_row = jnp.pad(x_row, ((0, 0), (0, n_pad - n)))

    kernel = partial(_mlp_kernel, chunk=chunk, use_bf16_dot=use_bf16_dot)

    out_row = pl.pallas_call(
        kernel,
        out_shape=jax.ShapeDtypeStruct((1, n_pad), jnp.float32),
        grid_spec=pltpu.PrefetchScalarGridSpec(
            num_scalar_prefetch=0,
            grid=(n_blocks,),
            in_specs=[
                pl.BlockSpec((1, tile_b), lambda i: (0, i)),   # x tile (lane-dense)
                pl.BlockSpec((h, h), lambda i: (0, 0)),        # fc2 weight (constant)
                pl.BlockSpec((h, 8), lambda i: (0, 0)),        # small params (constant)
            ],
            out_specs=pl.BlockSpec((1, tile_b), lambda i: (0, i)),
        ),
        compiler_params=pltpu.CompilerParams(
            # Batch tiles are independent -> shard across TensorCores on v7x.
            # TODO(synk): verify on v7x with xprof that this shards across both
            # TCs; switch to pltpu.CORE_PARALLEL if it stays on one core.
            dimension_semantics=("parallel",),
            vmem_limit_bytes=32 * 1024 * 1024,   # plenty for tile_b<=32K, safe on v7x
        ),
    )(x_row, w2, vecs)

    if n_pad != n:
        return out_row[0, :n].reshape(n, 1)
    return out_row.reshape(n, 1)


def init_params(key, hidden=HIDDEN):
    """Deterministic init mimicking nn.Linear's uniform(-1/sqrt(fan_in), 1/sqrt(fan_in)).

    Weights kept in PyTorch layout: weight (out_features, in_features), bias (out,).
    """
    k1, k2, k3, k4, k5, k6 = jax.random.split(key, 6)

    def uni(k, shape, fan_in):
        bound = 1.0 / jnp.sqrt(jnp.float32(fan_in))
        return jax.random.uniform(k, shape, jnp.float32, -bound, bound)

    return {
        "w1": uni(k1, (hidden, 1), 1),
        "b1": uni(k2, (hidden,), 1),
        "w2": uni(k3, (hidden, hidden), hidden),
        "b2": uni(k4, (hidden,), hidden),
        "w3": uni(k5, (1, hidden), hidden),
        "b3": uni(k6, (1,), hidden),
    }


def reference_forward(x, p):
    h1 = jnp.maximum(x @ p["w1"].T + p["b1"], 0.0)
    h2 = jnp.maximum(h1 @ p["w2"].T + p["b2"], 0.0)
    return h2 @ p["w3"].T + p["b3"]


if __name__ == "__main__":
    key = jax.random.PRNGKey(0)
    pkey, xkey = jax.random.split(key)

    params = init_params(pkey, hidden=HIDDEN)

    # Batch of scalar inputs (N, 1), consistent with nn.Linear(1, 32).  N is
    # intentionally NOT a multiple of the tile so the cdiv + padding path is
    # exercised.
    N = 1000
    x = jax.random.uniform(xkey, (N, 1), jnp.float32, -2.0, 2.0)

    ref = reference_forward(x, params)

    # 1) Full-f32 path with a small tile (exercises a multi-step grid) — tight check.
    out_f32 = parabola_net_forward(x, params, tile_b=512, chunk=512, use_bf16_dot=False)
    out_f32 = jax.block_until_ready(out_f32)
    assert out_f32.shape == (N, 1)
    assert jnp.allclose(out_f32, ref, atol=1e-4, rtol=1e-4), "f32 path mismatch vs reference"

    # 2) Fast path: large (clamped) tile, sub-chunked inner loop, bf16 MXU dot
    #    with f32 accumulation — looser tolerance per bf16 operand rounding.
    out_fast = parabola_net_forward(x, params, use_bf16_dot=True)
    out_fast = jax.block_until_ready(out_fast)
    assert out_fast.shape == (N, 1)
    assert jnp.allclose(out_fast, ref, atol=5e-2, rtol=5e-2), "bf16 path mismatch vs reference"

    print("KERNEL_OK")
</pallas_src>

<mosaic_0001>
module attributes {stable_mosaic.version = 11 : i64} {
  func.func @_mlp_kernel(%arg0: i32, %arg1: memref<1x512xf32, #tpu.memory_space<vmem>>, %arg2: memref<32x32xf32, #tpu.memory_space<vmem>>, %arg3: memref<32x8xf32, #tpu.memory_space<vmem>>, %arg4: memref<1x512xf32, #tpu.memory_space<vmem>>) attributes {dimension_semantics = [#tpu.dimension_semantics<parallel>], iteration_bounds = array<i64: 2>, scalar_prefetch = 0 : i64, scratch_operands = 0 : i64, tpu.core_type = #tpu.core_type<tc>, window_params = [{transform_indices = @transform_0, window_bounds = array<i64: 1, 512>}, {pipeline_mode = #tpu.pipeline_mode<synchronous>, transform_indices = @transform_1, window_bounds = array<i64: 32, 32>}, {pipeline_mode = #tpu.pipeline_mode<synchronous>, transform_indices = @transform_2, window_bounds = array<i64: 32, 8>}, {transform_indices = @transform_3, window_bounds = array<i64: 1, 512>}]} {
    %c0 = arith.constant 0 : index
    %c0_0 = arith.constant 0 : index
    %0 = vector.load %arg3[%c0, %c0_0] : memref<32x8xf32, #tpu.memory_space<vmem>>, vector<32x8xf32>
    %1 = vector.extract_strided_slice %0 {offsets = [0, 0], sizes = [32, 1], strides = [1, 1]} : vector<32x8xf32> to vector<32x1xf32>
    %2 = vector.extract_strided_slice %0 {offsets = [0, 1], sizes = [32, 1], strides = [1, 1]} : vector<32x8xf32> to vector<32x1xf32>
    %3 = vector.extract_strided_slice %0 {offsets = [0, 2], sizes = [32, 1], strides = [1, 1]} : vector<32x8xf32> to vector<32x1xf32>
    %4 = vector.extract_strided_slice %0 {offsets = [0, 3], sizes = [32, 1], strides = [1, 1]} : vector<32x8xf32> to vector<32x1xf32>
    %5 = vector.extract_strided_slice %0 {offsets = [0, 4], sizes = [1, 1], strides = [1, 1]} : vector<32x8xf32> to vector<1x1xf32>
    %c0_1 = arith.constant 0 : index
    %c0_2 = arith.constant 0 : index
    %6 = vector.load %arg2[%c0_1, %c0_2] : memref<32x32xf32, #tpu.memory_space<vmem>>, vector<32x32xf32>
    %c0_i32 = arith.constant 0 : i32
    %c512_i32 = arith.constant 512 : i32
    %7 = arith.muli %c0_i32, %c512_i32 : i32
    %8 = tpu.assume_multiple %7, 512 : i32
    %c0_3 = arith.constant 0 : index
    %9 = arith.index_cast %8 : i32 to index
    %10 = vector.load %arg1[%c0_3, %9] : memref<1x512xf32, #tpu.memory_space<vmem>>, vector<1x512xf32>
    %11 = vector.broadcast %1 : vector<32x1xf32> to vector<32x512xf32>
    %12 = vector.broadcast %10 : vector<1x512xf32> to vector<32x512xf32>
    %13 = arith.mulf %11, %12 : vector<32x512xf32>
    %14 = vector.broadcast %2 : vector<32x1xf32> to vector<32x512xf32>
    %15 = arith.addf %13, %14 : vector<32x512xf32>
    %cst = arith.constant 0.000000e+00 : f32
    %16 = vector.broadcast %cst : f32 to vector<32x512xf32>
    %17 = arith.maximumf %15, %16 : vector<32x512xf32>
    %cst_4 = arith.constant dense<0.000000e+00> : vector<32x512xf32>
    %18 = tpu.matmul %6, %17, %cst_4 {dimension_numbers = #tpu.dot_dimension_numbers<[1], [0], [0], [1], [0, 0, 1, 1], [], []>} : vector<32x32xf32>, vector<32x512xf32>, vector<32x512xf32> -> vector<32x512xf32>
    %19 = vector.broadcast %3 : vector<32x1xf32> to vector<32x512xf32>
    %20 = arith.addf %18, %19 : vector<32x512xf32>
    %cst_5 = arith.constant 0.000000e+00 : f32
    %21 = vector.broadcast %cst_5 : f32 to vector<32x512xf32>
    %22 = arith.maximumf %20, %21 : vector<32x512xf32>
    %23 = vector.broadcast %4 : vector<32x1xf32> to vector<32x512xf32>
    %24 = arith.mulf %23, %22 : vector<32x512xf32>
    %cst_6 = arith.constant dense<0.000000e+00> : vector<512xf32>
    %25 = vector.multi_reduction <add>, %24, %cst_6 [0] : vector<32x512xf32> to vector<512xf32>
    %26 = vector.shape_cast %25 : vector<512xf32> to vector<1x512xf32>
    %27 = vector.broadcast %5 : vector<1x1xf32> to vector<1x512xf32>
    %28 = arith.addf %26, %27 : vector<1x512xf32>
    %c0_7 = arith.constant 0 : index
    %29 = arith.index_cast %8 : i32 to index
    %30 = vector.load %arg4[%c0_7, %29] : memref<1x512xf32, #tpu.memory_space<vmem>>, vector<1x512xf32>
    tpu.vector_store %arg4[%c0_7, %29], %28 {strides = array<i32>} : memref<1x512xf32, #tpu.memory_space<vmem>>, vector<1x512xf32>,
    %c1_i32 = arith.constant 1 : i32
    return
  }
  func.func @transform_0(%arg0: i32) -> (i32, i32) {
    %c0_i32 = arith.constant 0 : i32
    %c0_i32_0 = arith.constant 0 : i32
    return %c0_i32, %arg0 : i32, i32
  }
  func.func @transform_1(%arg0: i32) -> (i32, i32) {
    %c0_i32 = arith.constant 0 : i32
    %c0_i32_0 = arith.constant 0 : i32
    %c0_i32_1 = arith.constant 0 : i32
    return %c0_i32, %c0_i32_0 : i32, i32
  }
  func.func @transform_2(%arg0: i32) -> (i32, i32) {
    %c0_i32 = arith.constant 0 : i32
    %c0_i32_0 = arith.constant 0 : i32
    %c0_i32_1 = arith.constant 0 : i32
    return %c0_i32, %c0_i32_0 : i32, i32
  }
  func.func @transform_3(%arg0: i32) -> (i32, i32) {
    %c0_i32 = arith.constant 0 : i32
    %c0_i32_0 = arith.constant 0 : i32
    return %c0_i32, %arg0 : i32, i32
  }
}

</mosaic_0001>

<llo_original>
// kernel: tpu_custom_call.1
$region0: #{tpu_custom_call.1}
  #allocation0 [shape = 'u32[]', space=smem, size = 0x4, offset = 0x4, fixed_abs, tag = 'smem constant byte address 0x4 - core index']
  #allocation1 [shape = 'u32[144,128]{1,0:T(1,128)}', space=vmem, size = 0x12000, scoped, tag = 'internal scratch']
  %s0 = inlined_call_operand.vmem [shape: f32[1,1024], index: 0, kind: input, shape index: {}]
  %s1 = inlined_call_operand.vmem [shape: f32[32,32], index: 1, kind: input, shape index: {}]
  %s2 = inlined_call_operand.vmem [shape: f32[32,8], index: 2, kind: input, shape index: {}]
  %s3 = inlined_call_operand.hbm [shape: f32[1,1024], index: 3, kind: output, shape index: {}]
  %s4 = sld [smem:[#allocation0]]
  $region45: #{tpu_custom_call.1} parent=0
    _
  %s6 = ssub.s32 1, %s4
  %s7 = scalar_select 0, %s6, %s4
  $region1: #{tpu_custom_call.1} parent=0
    #allocation2 [shape = 'u8[4096]{0}', space=vmem, size = 0x1000, scoped, tag = 'output window, operand 0']
    #allocation3 [shape = 's32[2]{0}', space=sflag, size = 0x8, scoped, tag = 'scoped memory for tpu_custom_call.1']
    %8 = vsyncpa [#allocation3], 0
    %s9 = scalar_lea.sflag [#allocation3], 1
    %10 = vsyncpa %s9, 0
    loop: start=0, step=1, limit=4
    $region2: #{tpu_custom_call.1} parent=1 // loop_pre_header
      _
    $region3: #{tpu_custom_call.1} parent=1 // loop_header
      %s12 = sphi 0, %s16
      %p13 = scmp.ge.s32.totalorder %s12, 4
      %s22 = sphi 0, %s24
      %s25 = sphi 0, %s22
      %s26 = sphi 0, %s25
      %s42 = sphi 0, %s26
      %s46 = sphi 0, %s46
      %s48 = sphi 0, %s46
      %s49 = sphi 0, %s48
      %s63 = sphi 0, %s49
      %s67 = sphi 0, %s67
      %s69 = sphi 0, %s67
      %s70 = sphi 0, %s69
      %s84 = sphi 0, %s70
      %s90 = sphi 0, %s92
      %s93 = sphi 0, %s90
      %s94 = sphi 0, %s93
      %s110 = sphi 0, %s94
    $region4: #{tpu_custom_call.1} parent=1 // loop_header_branch
      %15 = sbr.rel (%p13) target = $region8
    $region5: #{tpu_custom_call.1} parent=1 // loop_body
      %s17 = ssub.s32 %s12, 1
      %s18 = ssub.s32 %s12, 2
      %s19 = sadd.s32 %s12, 1
      %s20 = ssub.s32 %s12, %s19
      %p21 = scmp.eq.s32.totalorder %s20, 0
      %s23 = sadd.s32 %s22, 1
      %s24 = scalar_select %p21, %s22, %s23
      %p27 = pneg %p21
      %p28 = scmp.eq.s32.totalorder %s12, 1
      %p29 = por %p27, %p28
      %p30 = scmp.ne.s32.totalorder %s22, %s25
      %p31 = scmp.eq.s32.totalorder %s12, 0
      %p32 = por %p30, %p31
      %p33 = scmp.ne.s32.totalorder %s22, %s25
      %p34 = scmp.eq.s32.totalorder %s17, 1
      %p35 = por %p33, %p34
      %p36 = scmp.ne.s32.totalorder %s25, %s26
      %p37 = scmp.eq.s32.totalorder %s17, 0
      %p38 = por %p36, %p37
      %p39 = scmp.ne.s32.totalorder %s25, %s26
      %p40 = scmp.eq.s32.totalorder %s18, 1
      %p41 = por %p39, %p40
      %p43 = scmp.ne.s32.totalorder %s26, %s42
      %p44 = scmp.eq.s32.totalorder %s18, 0
      %p45 = por %p43, %p44
      %s47 = sadd.s32 %s46, 1
      %p50 = scmp.eq.s32.totalorder %s12, 1
      %p51 = scmp.ne.s32.totalorder %s46, %s48
      %p52 = scmp.eq.s32.totalorder %s12, 0
      %p53 = por %p51, %p52
      %p54 = scmp.ne.s32.totalorder %s46, %s48
      %p55 = scmp.eq.s32.totalorder %s17, 1
      %p56 = por %p54, %p55
      %p57 = scmp.ne.s32.totalorder %s48, %s49
      %p58 = scmp.eq.s32.totalorder %s17, 0
      %p59 = por %p57, %p58
      %p60 = scmp.ne.s32.totalorder %s48, %s49
      %p61 = scmp.eq.s32.totalorder %s18, 1
      %p62 = por %p60, %p61
      %p64 = scmp.ne.s32.totalorder %s49, %s63
      %p65 = scmp.eq.s32.totalorder %s18, 0
      %p66 = por %p64, %p65
      %s68 = sadd.s32 %s67, 1
      %p71 = scmp.eq.s32.totalorder %s12, 1
      %p72 = scmp.ne.s32.totalorder %s67, %s69
      %p73 = scmp.eq.s32.totalorder %s12, 0
      %p74 = por %p72, %p73
      %p75 = scmp.ne.s32.totalorder %s67, %s69
      %p76 = scmp.eq.s32.totalorder %s17, 1
      %p77 = por %p75, %p76
      %p78 = scmp.ne.s32.totalorder %s69, %s70
      %p79 = scmp.eq.s32.totalorder %s17, 0
      %p80 = por %p78, %p79
      %p81 = scmp.ne.s32.totalorder %s69, %s70
      %p82 = scmp.eq.s32.totalorder %s18, 1
      %p83 = por %p81, %p82
      %p85 = scmp.ne.s32.totalorder %s70, %s84
      %p86 = scmp.eq.s32.totalorder %s18, 0
      %p87 = por %p85, %p86
      %s88 = ssub.s32 %s12, %s19
      %p89 = scmp.eq.s32.totalorder %s88, 0
      %s91 = sadd.s32 %s90, 1
      %s92 = scalar_select %p89, %s90, %s91
      %p95 = pneg %p89
      %p96 = scmp.eq.s32.totalorder %s12, 1
      %p97 = por %p95, %p96
      %p98 = scmp.ne.s32.totalorder %s90, %s93
      %p99 = scmp.eq.s32.totalorder %s12, 0
      %p100 = por %p98, %p99
      %p101 = scmp.ne.s32.totalorder %s90, %s93
      %p102 = scmp.eq.s32.totalorder %s17, 1
      %p103 = por %p101, %p102
      %p104 = scmp.ne.s32.totalorder %s93, %s94
      %p105 = scmp.eq.s32.totalorder %s17, 0
      %p106 = por %p104, %p105
      %p107 = scmp.ne.s32.totalorder %s93, %s94
      %p108 = scmp.eq.s32.totalorder %s18, 1
      %p109 = por %p107, %p108
      %p111 = scmp.ne.s32.totalorder %s94, %s110
      %p112 = scmp.eq.s32.totalorder %s18, 0
      %p113 = por %p111, %p112
      %p114 = scmp.le.s32.totalorder 1, %s12
      %p115 = scmp.lt.s32.totalorder %s12, 3
      %p116 = pnand %p114, %p115
      %p117 = pneg %p116
      // Predicated region
      $region9: #{tpu_custom_call.1} parent=5 // pred_check
        _
      $region10: #{tpu_custom_call.1} parent=5 // pred_check_branch
        %119 = sbr.rel (%p116) target = $region12
      $region11: #{tpu_custom_call.1} parent=5 // pred_region
        %s120 = ssub.s32 %s12, 1
        // Predicated region
        $region13: #{tpu_custom_call.1} parent=11 // pred_check
          %p121 = pneg %p59
        $region14: #{tpu_custom_call.1} parent=11 // pred_check_branch
          %123 = sbr.rel (%p121) target = $region16
        $region15: #{tpu_custom_call.1} parent=11 // pred_region
          _
        $region16: #{tpu_custom_call.1} parent=11 // pred_fallthru
          _
        // Predicated region
        $region17: #{tpu_custom_call.1} parent=11 // pred_check
          %p124 = pneg %p80
        $region18: #{tpu_custom_call.1} parent=11 // pred_check_branch
          %126 = sbr.rel (%p124) target = $region20
        $region19: #{tpu_custom_call.1} parent=11 // pred_region
          _
        $region20: #{tpu_custom_call.1} parent=11 // pred_fallthru
          _
      $region12: #{tpu_custom_call.1} parent=5 // pred_fallthru
        _
      %p127 = scmp.lt.s32.totalorder %s12, 2
      // Predicated region
      $region21: #{tpu_custom_call.1} parent=5 // pred_check
        %p128 = pneg %p127
      $region22: #{tpu_custom_call.1} parent=5 // pred_check_branch
        %130 = sbr.rel (%p128) target = $region24
      $region23: #{tpu_custom_call.1} parent=5 // pred_region
        // Predicated region
        $region25: #{tpu_custom_call.1} parent=23 // pred_check
          %p131 = pneg %p32
        $region26: #{tpu_custom_call.1} parent=23 // pred_check_branch
          %133 = sbr.rel (%p131) target = $region28
        $region27: #{tpu_custom_call.1} parent=23 // pred_region
          %s134 = smul.u32 4, %s12
          %p135 = scmp.lt.s32.totalorder %s134, 7
          %s136 = scalar_select %p135, %s134, 7
          %s137 = scalar_lea.vmem %s0, %s136
          %s138 = smul.u32 4, %s12
        $region28: #{tpu_custom_call.1} parent=23 // pred_fallthru
          _
      $region24: #{tpu_custom_call.1} parent=5 // pred_fallthru
        _
      %p139 = scmp.le.s32.totalorder 1, %s12
      %p140 = scmp.lt.s32.totalorder %s12, 3
      %p141 = pnand %p139, %p140
      %p142 = pneg %p141
      // Predicated region
      $region29: #{tpu_custom_call.1} parent=5 // pred_check
        _
      $region30: #{tpu_custom_call.1} parent=5 // pred_check_branch
        %144 = sbr.rel (%p141) target = $region32
      $region31: #{tpu_custom_call.1} parent=5 // pred_region
        %s145 = ssub.s32 %s12, 1
        %s146 = smul.u32 4, %s17
        %p147 = scmp.lt.s32.totalorder %s146, 7
        %s148 = scalar_select %p147, %s146, 7
        %s149 = scalar_lea.vmem %s0, %s148
        %p150 = pneg %p38
        %p151 = pneg %p35
        %p152 = pneg %p59
        %p153 = pneg %p56
        %p154 = pneg %p80
        %p155 = pneg %p77
        %p156 = pneg %p106
        %p157 = pneg %p103
        %s158 = sand.u32 %s93, 1
        %s159 = scalar_lea.sflag [#allocation3], %s158
        %s160 = sand.u32 %s93, 1
        %s161 = smul.addr %s160, 4
        %s162 = scalar_lea.vmem [#allocation2], %s161
        %s163 = smul.u32 4, %s17
        %p164 = scmp.lt.s32.totalorder %s163, 7
        %s165 = scalar_select %p164, %s163, 7
        %s166 = scalar_lea.vmem %s0, %s165
        %s167 = smul.u32 4, %s17
        %s168 = smul.u32 4, %s17
        %v169 = vld [vmem:[%s2] sm:$0xff]
        %v170 = vld [vmem:[%s2 + $0x8] sm:$0xff]
        %v171 = vld [vmem:[%s2 + $0x10] sm:$0xff]
        %v172 = vld [vmem:[%s2 + $0x18] sm:$0xff]
        %v173 = vld [vmem:[%s1] sm:$0xff]
        %v174 = vld [vmem:[%s1 + $0x8] sm:$0xff]
        %v175 = vld [vmem:[%s1 + $0x10] sm:$0xff]
        %v176 = vld [vmem:[%s1 + $0x18] sm:$0xff]
        %v177 = vld [vmem:[%s166] sm:$0xf]
        %179 = vset.pattern.permute.xlu0 0
        %180 = vperm.xlu0 %179, %v169
        %v181 = vpop.permute.xlu0 %180
        %184 = vset.pattern.permute.xlu0 0
        %185 = vperm.xlu0 %184, %v170
        %v186 = vpop.permute.xlu0 %185
        %189 = vset.pattern.permute.xlu0 0
        %190 = vperm.xlu0 %189, %v171
        %v191 = vpop.permute.xlu0 %190
        %194 = vset.pattern.permute.xlu0 0
        %195 = vperm.xlu0 %194, %v172
        %v196 = vpop.permute.xlu0 %195
        %v199 = vlaneseq
        %v200 = vshrl.u32 %v199, 7
        %v201 = vsub.s32 0, %v200
        %v202 = vrot.slane %v177, %v201
        %v203 = vlaneseq
        %v204 = vshrl.u32 %v203, 7
        %v205 = vsub.s32 1, %v204
        %v206 = vrot.slane %v177, %v205
        %v207 = vlaneseq
        %v208 = vshrl.u32 %v207, 7
        %v209 = vsub.s32 2, %v208
        %v210 = vrot.slane %v177, %v209
        %v211 = vlaneseq
        %v212 = vshrl.u32 %v211, 7
        %v213 = vsub.s32 3, %v212
        %v214 = vrot.slane %v177, %v213
        %v219 = vmul.f32 %v181, %v202
        %v220 = vmul.f32 %v181, %v206
        %v221 = vmul.f32 %v181, %v210
        %v222 = vmul.f32 %v181, %v214
        %v223 = vmul.f32 %v186, %v202
        %v224 = vmul.f32 %v186, %v206
        %v225 = vmul.f32 %v186, %v210
        %v226 = vmul.f32 %v186, %v214
        %v227 = vmul.f32 %v191, %v202
        %v228 = vmul.f32 %v191, %v206
        %v229 = vmul.f32 %v191, %v210
        %v230 = vmul.f32 %v191, %v214
        %v231 = vmul.f32 %v196, %v202
        %v232 = vmul.f32 %v196, %v206
        %v233 = vmul.f32 %v196, %v210
        %v234 = vmul.f32 %v196, %v214
        %235 = vset.pattern.permute.xlu0 1
        %236 = vperm.xlu0 %235, %v169
        %v237 = vpop.permute.xlu0 %236
        %239 = vset.pattern.permute.xlu0 1
        %240 = vperm.xlu0 %239, %v170
        %v241 = vpop.permute.xlu0 %240
        %243 = vset.pattern.permute.xlu0 1
        %244 = vperm.xlu0 %243, %v171
        %v245 = vpop.permute.xlu0 %244
        %247 = vset.pattern.permute.xlu0 1
        %248 = vperm.xlu0 %247, %v172
        %v249 = vpop.permute.xlu0 %248
        %v251 = vadd.f32 %v219, %v237
        %v252 = vadd.f32 %v220, %v237
        %v253 = vadd.f32 %v221, %v237
        %v254 = vadd.f32 %v222, %v237
        %v255 = vadd.f32 %v223, %v241
        %v256 = vadd.f32 %v224, %v241
        %v257 = vadd.f32 %v225, %v241
        %v258 = vadd.f32 %v226, %v241
        %v259 = vadd.f32 %v227, %v245
        %v260 = vadd.f32 %v228, %v245
        %v261 = vadd.f32 %v229, %v245
        %v262 = vadd.f32 %v230, %v245
        %v263 = vadd.f32 %v231, %v249
        %v264 = vadd.f32 %v232, %v249
        %v265 = vadd.f32 %v233, %v249
        %v266 = vadd.f32 %v234, %v249
        %v267 = vmax.f32 %v251, 0.0
        %v268 = vmax.f32 %v252, 0.0
        %v269 = vmax.f32 %v253, 0.0
        %v270 = vmax.f32 %v254, 0.0
        %v271 = vmax.f32 %v255, 0.0
        %v272 = vmax.f32 %v256, 0.0
        %v273 = vmax.f32 %v257, 0.0
        %v274 = vmax.f32 %v258, 0.0
        %v275 = vmax.f32 %v259, 0.0
        %v276 = vmax.f32 %v260, 0.0
        %v277 = vmax.f32 %v261, 0.0
        %v278 = vmax.f32 %v262, 0.0
        %v279 = vmax.f32 %v263, 0.0
        %v280 = vmax.f32 %v264, 0.0
        %v281 = vmax.f32 %v265, 0.0
        %v282 = vmax.f32 %v266, 0.0
        %283 = vset.pattern.permute.xlu0 2
        %284 = vperm.xlu0 %283, %v169
        %v285 = vpop.permute.xlu0 %284
        %287 = vset.pattern.permute.xlu0 2
        %288 = vperm.xlu0 %287, %v170
        %v289 = vpop.permute.xlu0 %288
        %291 = vset.pattern.permute.xlu0 2
        %292 = vperm.xlu0 %291, %v171
        %v293 = vpop.permute.xlu0 %292
        %295 = vset.pattern.permute.xlu0 2
        %296 = vperm.xlu0 %295, %v172
        %v297 = vpop.permute.xlu0 %296
        %vm299 = vcmask 261120
        %v301 = vsel %vm299, %v173, 0
        %v304 = vsel %vm299, %v174, 0
        %v307 = vsel %vm299, %v175, 0
        %v310 = vsel %vm299, %v176, 0
        %312 = vmatprep.subr.mxu0 %v268
        %313 = vmatpush1.msra.mxu0 %v267
        %314 = vmatprep.subr.mxu0 %v272
        %315 = vmatpush1.msra.mxu0 %v271
        %316 = vmatprep.subr.mxu0 %v276
        %317 = vmatpush1.msra.mxu0 %v275
        %318 = vmatprep.subr.mxu0 %v280
        %319 = vmatpush1.msra.mxu0 %v279
        %320 = vmatprep.subr.mxu0 0.0
        %321 = vmatpush1.msra.mxu0 0.0
        %322 = vmatprep.subr.mxu0 0.0
        %323 = vmatpush1.msra.mxu0 0.0
        %324 = vmatprep.subr.mxu0 0.0
        %325 = vmatpush1.msra.mxu0 0.0
        %326 = vmatprep.subr.mxu0 0.0
        %327 = vmatpush1.msra.mxu0 0.0
        %328 = vmatprep.subr.mxu0 0.0
        %329 = vmatpush1.msra.mxu0 0.0
        %330 = vmatprep.subr.mxu0 0.0
        %331 = vmatpush1.msra.mxu0 0.0
        %332 = vmatprep.subr.mxu0 0.0
        %333 = vmatpush1.msra.mxu0 0.0
        %334 = vmatprep.subr.mxu0 0.0
        %335 = vmatpush1.msra.mxu0 0.0
        %336 = vmatprep.subr.mxu0 0.0
        %337 = vmatpush1.msra.mxu0 0.0
        %338 = vmatprep.subr.mxu0 0.0
        %339 = vmatpush1.msra.mxu0 0.0
        %340 = vmatprep.subr.mxu0 0.0
        %341 = vmatpush1.msra.mxu0 0.0
        %342 = vmatprep.subr.mxu0 0.0
        %343 = vmatpush1.msra.mxu0 0.0
        %344 = vmatprep.subr.mxu0 0.0
        %345 = vmatpush1.msra.mxu0 0.0
        %346 = vmatprep.subr.mxu0 0.0
        %347 = vmatpush1.msra.mxu0 0.0
        %348 = vmatprep.subr.mxu0 0.0
        %349 = vmatpush1.msra.mxu0 0.0
        %350 = vmatprep.subr.mxu0 0.0
        %351 = vmatpush1.msra.mxu0 0.0
        %352 = vmatprep.subr.mxu0 0.0
        %353 = vmatpush1.msra.mxu0 0.0
        %354 = vmatprep.subr.mxu0 0.0
        %355 = vmatpush1.msra.mxu0 0.0
        %356 = vmatprep.subr.mxu0 0.0
        %357 = vmatpush1.msra.mxu0 0.0
        %358 = vmatprep.subr.mxu0 0.0
        %359 = vmatpush1.msra.mxu0 0.0
        %360 = vmatprep.subr.mxu0 0.0
        %361 = vmatpush1.msra.mxu0 0.0
        %362 = vmatprep.subr.mxu0 0.0
        %363 = vmatpush1.msra.mxu0 0.0
        %364 = vmatprep.subr.mxu0 0.0
        %365 = vmatpush1.msra.mxu0 0.0
        %366 = vmatprep.subr.mxu0 0.0
        %367 = vmatpush1.msra.mxu0 0.0
        %368 = vmatprep.subr.mxu0 0.0
        %369 = vmatpush1.msra.mxu0 0.0
        %370 = vmatprep.subr.mxu0 0.0
        %371 = vmatpush1.msra.mxu0 0.0
        %372 = vmatprep.subr.mxu0 0.0
        %373 = vmatpush1.msra.mxu0 0.0
        %374 = vmatprep.subr.mxu0 0.0
        %375 = vmatpush1.msra.mxu0 0.0
        %376 = vmatprep.mubr.f32.mxu0 0.0
        %377 = vmatmul.mubr.f32.gmra.mrb[0].mxu0 %v301
        %v378 = vpop.f32.mrb[0].mxu0
        %v379 = vadd.f32 %v285, %v378
        %v380 = vpop.f32.mrb[0].mxu0
        %v381 = vadd.f32 %v285, %v380
        %382 = vmatprep.mubr.f32.mxu0 0.0
        %383 = vmatmul.mubr.f32.gmra.mrb[0].mxu0 %v304
        %v384 = vpop.f32.mrb[0].mxu0
        %v385 = vadd.f32 %v289, %v384
        %v386 = vpop.f32.mrb[0].mxu0
        %v387 = vadd.f32 %v289, %v386
        %388 = vmatprep.mubr.f32.mxu0 0.0
        %389 = vmatmul.mubr.f32.gmra.mrb[0].mxu0 %v307
        %v390 = vpop.f32.mrb[0].mxu0
        %v391 = vadd.f32 %v293, %v390
        %v392 = vpop.f32.mrb[0].mxu0
        %v393 = vadd.f32 %v293, %v392
        %394 = vmatprep.mubr.f32.mxu0 0.0
        %395 = vmatmul.mubr.f32.gmra.mrb[0].mxu0 %v310
        %v396 = vpop.f32.mrb[0].mxu0
        %v397 = vadd.f32 %v297, %v396
        %v398 = vpop.f32.mrb[0].mxu0
        %v399 = vadd.f32 %v297, %v398
        %400 = vdwg.mxu0
        %401 = vmatprep.subr.mxu0 %v270
        %402 = vmatpush1.msra.mxu0 %v269
        %403 = vmatprep.subr.mxu0 %v274
        %404 = vmatpush1.msra.mxu0 %v273
        %405 = vmatprep.subr.mxu0 %v278
        %406 = vmatpush1.msra.mxu0 %v277
        %407 = vmatprep.subr.mxu0 %v282
        %408 = vmatpush1.msra.mxu0 %v281
        %409 = vmatprep.subr.mxu0 0.0
        %410 = vmatpush1.msra.mxu0 0.0
        %411 = vmatprep.subr.mxu0 0.0
        %412 = vmatpush1.msra.mxu0 0.0
        %413 = vmatprep.subr.mxu0 0.0
        %414 = vmatpush1.msra.mxu0 0.0
        %415 = vmatprep.subr.mxu0 0.0
        %416 = vmatpush1.msra.mxu0 0.0
        %417 = vmatprep.subr.mxu0 0.0
        %418 = vmatpush1.msra.mxu0 0.0
        %419 = vmatprep.subr.mxu0 0.0
        %420 = vmatpush1.msra.mxu0 0.0
        %421 = vmatprep.subr.mxu0 0.0
        %422 = vmatpush1.msra.mxu0 0.0
        %423 = vmatprep.subr.mxu0 0.0
        %424 = vmatpush1.msra.mxu0 0.0
        %425 = vmatprep.subr.mxu0 0.0
        %426 = vmatpush1.msra.mxu0 0.0
        %427 = vmatprep.subr.mxu0 0.0
        %428 = vmatpush1.msra.mxu0 0.0
        %429 = vmatprep.subr.mxu0 0.0
        %430 = vmatpush1.msra.mxu0 0.0
        %431 = vmatprep.subr.mxu0 0.0
        %432 = vmatpush1.msra.mxu0 0.0
        %433 = vmatprep.subr.mxu0 0.0
        %434 = vmatpush1.msra.mxu0 0.0
        %435 = vmatprep.subr.mxu0 0.0
        %436 = vmatpush1.msra.mxu0 0.0
        %437 = vmatprep.subr.mxu0 0.0
        %438 = vmatpush1.msra.mxu0 0.0
        %439 = vmatprep.subr.mxu0 0.0
        %440 = vmatpush1.msra.mxu0 0.0
        %441 = vmatprep.subr.mxu0 0.0
        %442 = vmatpush1.msra.mxu0 0.0
        %443 = vmatprep.subr.mxu0 0.0
        %444 = vmatpush1.msra.mxu0 0.0
        %445 = vmatprep.subr.mxu0 0.0
        %446 = vmatpush1.msra.mxu0 0.0
        %447 = vmatprep.subr.mxu0 0.0
        %448 = vmatpush1.msra.mxu0 0.0
        %449 = vmatprep.subr.mxu0 0.0
        %450 = vmatpush1.msra.mxu0 0.0
        %451 = vmatprep.subr.mxu0 0.0
        %452 = vmatpush1.msra.mxu0 0.0
        %453 = vmatprep.subr.mxu0 0.0
        %454 = vmatpush1.msra.mxu0 0.0
        %455 = vmatprep.subr.mxu0 0.0
        %456 = vmatpush1.msra.mxu0 0.0
        %457 = vmatprep.subr.mxu0 0.0
        %458 = vmatpush1.msra.mxu0 0.0
        %459 = vmatprep.subr.mxu0 0.0
        %460 = vmatpush1.msra.mxu0 0.0
        %461 = vmatprep.subr.mxu0 0.0
        %462 = vmatpush1.msra.mxu0 0.0
        %463 = vmatprep.subr.mxu0 0.0
        %464 = vmatpush1.msra.mxu0 0.0
        %465 = vmatprep.mubr.f32.mxu0 0.0
        %466 = vmatmul.mubr.f32.gmra.mrb[0].mxu0 %v301
        %v467 = vpop.f32.mrb[0].mxu0
        %v468 = vadd.f32 %v285, %v467
        %v469 = vpop.f32.mrb[0].mxu0
        %v470 = vadd.f32 %v285, %v469
        %471 = vmatprep.mubr.f32.mxu0 0.0
        %472 = vmatmul.mubr.f32.gmra.mrb[0].mxu0 %v304
        %v473 = vpop.f32.mrb[0].mxu0
        %v474 = vadd.f32 %v289, %v473
        %v475 = vpop.f32.mrb[0].mxu0
        %v476 = vadd.f32 %v289, %v475
        %477 = vmatprep.mubr.f32.mxu0 0.0
        %478 = vmatmul.mubr.f32.gmra.mrb[0].mxu0 %v307
        %v479 = vpop.f32.mrb[0].mxu0
        %v480 = vadd.f32 %v293, %v479
        %v481 = vpop.f32.mrb[0].mxu0
        %v482 = vadd.f32 %v293, %v481
        %483 = vmatprep.mubr.f32.mxu0 0.0
        %484 = vmatmul.mubr.f32.gmra.mrb[0].mxu0 %v310
        %v485 = vpop.f32.mrb[0].mxu0
        %v486 = vadd.f32 %v297, %v485
        %v487 = vpop.f32.mrb[0].mxu0
        %v488 = vadd.f32 %v297, %v487
        %489 = vdwg.mxu0
        %v490 = vmax.f32 %v379, 0.0
        %v491 = vmax.f32 %v381, 0.0
        %v492 = vmax.f32 %v468, 0.0
        %v493 = vmax.f32 %v470, 0.0
        %v494 = vmax.f32 %v385, 0.0
        %v495 = vmax.f32 %v387, 0.0
        %v496 = vmax.f32 %v474, 0.0
        %v497 = vmax.f32 %v476, 0.0
        %v498 = vmax.f32 %v391, 0.0
        %v499 = vmax.f32 %v393, 0.0
        %v500 = vmax.f32 %v480, 0.0
        %v501 = vmax.f32 %v482, 0.0
        %v502 = vmax.f32 %v397, 0.0
        %v503 = vmax.f32 %v399, 0.0
        %v504 = vmax.f32 %v486, 0.0
        %v505 = vmax.f32 %v488, 0.0
        %506 = vset.pattern.permute.xlu0 3
        %507 = vperm.xlu0 %506, %v169
        %v508 = vpop.permute.xlu0 %507
        %510 = vset.pattern.permute.xlu0 3
        %511 = vperm.xlu0 %510, %v170
        %v512 = vpop.permute.xlu0 %511
        %514 = vset.pattern.permute.xlu0 3
        %515 = vperm.xlu0 %514, %v171
        %v516 = vpop.permute.xlu0 %515
        %518 = vset.pattern.permute.xlu0 3
        %519 = vperm.xlu0 %518, %v172
        %v520 = vpop.permute.xlu0 %519
        %v522 = vmul.f32 %v508, %v490
        %v523 = vmul.f32 %v508, %v491
        %v524 = vmul.f32 %v508, %v492
        %v525 = vmul.f32 %v508, %v493
        %v526 = vmul.f32 %v512, %v494
        %v527 = vmul.f32 %v512, %v495
        %v528 = vmul.f32 %v512, %v496
        %v529 = vmul.f32 %v512, %v497
        %v530 = vmul.f32 %v516, %v498
        %v531 = vmul.f32 %v516, %v499
        %v532 = vmul.f32 %v516, %v500
        %v533 = vmul.f32 %v516, %v501
        %v534 = vmul.f32 %v520, %v502
        %v535 = vmul.f32 %v520, %v503
        %v536 = vmul.f32 %v520, %v504
        %v537 = vmul.f32 %v520, %v505
        %v538 = vadd.f32 %v522, %v526
        %v539 = vadd.f32 %v538, %v530
        %v540 = vadd.f32 %v539, %v534
        %v541 = vrot.slane %v540, 4
        %v542 = vadd.f32 %v540, %v541
        %v543 = vrot.slane %v542, 2
        %v544 = vadd.f32 %v542, %v543
        %v545 = vrot.slane %v544, 1
        %v546 = vadd.f32 %v544, %v545
        %v547 = vadd.f32 %v523, %v527
        %v548 = vadd.f32 %v547, %v531
        %v549 = vadd.f32 %v548, %v535
        %v550 = vrot.slane %v549, 4
        %v551 = vadd.f32 %v549, %v550
        %v552 = vrot.slane %v551, 2
        %v553 = vadd.f32 %v551, %v552
        %v554 = vrot.slane %v553, 1
        %v555 = vadd.f32 %v553, %v554
        %v556 = vadd.f32 %v524, %v528
        %v557 = vadd.f32 %v556, %v532
        %v558 = vadd.f32 %v557, %v536
        %v559 = vrot.slane %v558, 4
        %v560 = vadd.f32 %v558, %v559
        %v561 = vrot.slane %v560, 2
        %v562 = vadd.f32 %v560, %v561
        %v563 = vrot.slane %v562, 1
        %v564 = vadd.f32 %v562, %v563
        %v565 = vadd.f32 %v525, %v529
        %v566 = vadd.f32 %v565, %v533
        %v567 = vadd.f32 %v566, %v537
        %v568 = vrot.slane %v567, 4
        %v569 = vadd.f32 %v567, %v568
        %v570 = vrot.slane %v569, 2
        %v571 = vadd.f32 %v569, %v570
        %v572 = vrot.slane %v571, 1
        %v573 = vadd.f32 %v571, %v572
        %574 = vset.pattern.permute.xlu0 4
        %575 = vperm.xlu0 %574, %v169
        %v576 = vpop.permute.xlu0 %575
        %v578 = vadd.f32 %v546, %v576
        %v579 = vadd.f32 %v555, %v576
        %v580 = vadd.f32 %v564, %v576
        %v581 = vadd.f32 %v573, %v576
        %v586 = vcombine.low %v578, %v579
        %v587 = vcombine.low %v580, %v581
        %v589 = vunpack.c.l.s4 1966171168
        %v590 = vunpack.c.0.s8 %v589
        %v591 = vlaneseq
        %v592 = vshrl.u32 %v591, 7
        %v593 = vsub.s32 %v590, %v592
        %v594 = vrot.slane %v586, %v593
        %v596 = vunpack.c.l.s4 1966171168
        %v597 = vunpack.c.0.s8 %v596
        %v598 = vlaneseq
        %v599 = vshrl.u32 %v598, 7
        %v600 = vsub.s32 %v597, %v599
        %v601 = vrot.slane %v587, %v600
        %v602 = vcombine.low %v594, %v601
        %v604 = vunpack.c.l.s4 1966171168
        %v605 = vunpack.c.0.s8 %v604
        %v606 = vlaneseq
        %v607 = vshrl.u32 %v606, 7
        %v608 = vsub.s32 %v605, %v607
        %v609 = vrot.slane %v602, %v608
        %v611 = vlaneseq
        %vm612 = vcmp.ge.s32.totalorder %v611, 0
        %vm613 = vcmp.lt.s32.totalorder %v611, 512
        %vm614 = vmand %vm612, %vm613
        %615 = vst.msk [vmem:[%s162] sm:$0xf] %vm614, %v609
        %s616 = sand.u32 %s93, 1
        %s617 = scalar_lea.sflag [#allocation3], %s616
        %s618 = sand.u32 %s93, 1
        %s619 = smul.addr %s618, 4
        %s620 = scalar_lea.vmem [#allocation2], %s619
        // Predicated region
        $region33: #{tpu_custom_call.1} parent=31 // pred_check
          %p621 = pneg %p103
        $region34: #{tpu_custom_call.1} parent=31 // pred_check_branch
          %623 = sbr.rel (%p621) target = $region36
        $region35: #{tpu_custom_call.1} parent=31 // pred_region
          %s624 = smul.u32 4, %s17
          %s626 = ssub.s32 64, 64
          %627 = vsyncadd %s617, %s626
          %s628 = smul.addr %s624, 16
          %s629 = scalar_lea.hbm %s3, %s628
          %s631 = sshll.u32 %s620, 4
          %s632 = int_to_ptr.vmem [resolvable:$true] %s631
          %634 = dma.vmem_to_hbm [thread:$0]  %s632, 64, %s629, %s617
        $region36: #{tpu_custom_call.1} parent=31 // pred_fallthru
          _
      $region32: #{tpu_custom_call.1} parent=5 // pred_fallthru
        _
      %p635 = scmp.le.s32.totalorder 2, %s12
      // Predicated region
      $region37: #{tpu_custom_call.1} parent=5 // pred_check
        %p636 = pneg %p635
      $region38: #{tpu_custom_call.1} parent=5 // pred_check_branch
        %638 = sbr.rel (%p636) target = $region40
      $region39: #{tpu_custom_call.1} parent=5 // pred_region
        %s639 = ssub.s32 %s12, 2
        // Predicated region
        $region41: #{tpu_custom_call.1} parent=39 // pred_check
          %p640 = pneg %p109
        $region42: #{tpu_custom_call.1} parent=39 // pred_check_branch
          %642 = sbr.rel (%p640) target = $region44
        $region43: #{tpu_custom_call.1} parent=39 // pred_region
          %s643 = sand.u32 %s94, 1
          %s644 = scalar_lea.sflag [#allocation3], %s643
          %s645 = sand.u32 %s94, 1
          %s646 = smul.addr %s645, 4
          %s647 = scalar_lea.vmem [#allocation2], %s646
          %648 = dma.done %s644, 64
        $region44: #{tpu_custom_call.1} parent=39 // pred_fallthru
          _
      $region40: #{tpu_custom_call.1} parent=5 // pred_fallthru
        _
    $region6: #{tpu_custom_call.1} parent=1 // loop_footer
      %s16 = sadd.s32 1, %s12
    $region7: #{tpu_custom_call.1} parent=1 // loop_footer_branch
      %11 = sbr.rel target = $region3
    $region8: #{tpu_custom_call.1} parent=1 // loop_exit
      _
    %649 = vsyncpa [#allocation3], 1
    %s650 = scalar_lea.sflag [#allocation3], 1
    %651 = vsyncpa %s650, 1

</llo_original>
